<compile_context>
chip_gen: v7x
topology: tpu7x:2x2x1
jax: 0.10.0
libtpu: 0.0.40
codegen_flags: <defaults>
</compile_context>

<pallas_src>
import functools

import jax
import jax.numpy as jnp
from jax.experimental import pallas as pl
from jax.experimental.pallas import tpu as pltpu

EPSILON = 1e-06


def _round_up(x: int, m: int) -> int:
    return ((x + m - 1) // m) * m


def _vmem_budget_and_limit():
    """Generation-aware VMEM budget for the double-buffered input windows."""
    try:
        phys = int(getattr(pltpu.get_tpu_info(), "vmem_capacity_bytes", 0))
    except Exception:
        phys = 0
    if phys <= 0:
        phys = 64 << 20                      # conservative fallback: v7x per-TC VMEM
    budget = int(min(28 << 20, max(12 << 20, (phys * 2) // 5)))
    vmem_limit = int(min(phys // 2, budget + (8 << 20)))
    return budget, vmem_limit


def _dice_partials_kernel(logits_ref, targets_ref,
                          inter_out, psum_out, tsum_out,
                          inter_acc, psum_acc, tsum_acc,
                          *, hw_total: int, tile_hw: int, chunk: int,
                          spatial_splits: int, tiles_per_split: int,
                          needs_mask: bool):
    p = pl.program_id(0)      # parallel slice: batch (x optional spatial split)
    j = pl.program_id(1)      # spatial tile within the slice (reduction axis)

    @pl.when(j == 0)
    def _():
        inter_acc[...] = jnp.zeros_like(inter_acc)
        psum_acc[...] = jnp.zeros_like(psum_acc)
        tsum_acc[...] = jnp.zeros_like(tsum_acc)

    if spatial_splits == 1:
        j_global = j
    else:
        j_global = (p % spatial_splits) * tiles_per_split + j
    tile_base = j_global * tile_hw
    num_chunks = tile_hw // chunk            # static Python int

    def run_chunks(masked: bool):
        def chunk_step(off):
            x = logits_ref[0, :, pl.ds(off, chunk)].astype(jnp.float32)   # (C, chunk)
            t = targets_ref[0, :, pl.ds(off, chunk)].astype(jnp.float32)  # (C, chunk)
            if masked:
                # Zero invalid lanes BEFORE the exp so garbage cannot
                # propagate through the softmax.
                lane = jax.lax.broadcasted_iota(jnp.int32, (1, chunk), 1)
                valid = (tile_base + off + lane) < hw_total               # (1, chunk)
                x = jnp.where(valid, x, 0.0)
                t = jnp.where(valid, t, 0.0)
            # Softmax over the class (sublane) axis == PyTorch dim=1.
            # TODO(synk): for C<=4, pack 8//C batch rows into the sublane dim
            # (or do the class-sum as a ones-vector MXU matmul) if the bundle
            # dump shows these XLU reduces capping HBM throughput.
            m = jnp.max(x, axis=0, keepdims=True)                         # (1, chunk)
            e = jnp.exp(x - m)                                            # (C, chunk)
            s = jnp.sum(e, axis=0, keepdims=True)                         # (1, chunk)
            prob = e * pl.reciprocal(s, approx=False)                     # (C, chunk)
            if masked:
                prob = jnp.where(valid, prob, 0.0)
            # Lane-resident per-class partial sums; cardinality = tsum + psum
            # is reconstructed in the plain-JAX epilogue.
            inter_acc[...] += t * prob
            psum_acc[...] += prob
            tsum_acc[...] += t

        if num_chunks <= 4:
            for k in range(num_chunks):       # short static loop -> unrolled
                chunk_step(k * chunk)
        else:
            def body(k, carry):
                chunk_step(pl.multiple_of(k * chunk, chunk))
                return carry
            jax.lax.fori_loop(0, num_chunks, body, 0)

    if needs_mask:
        # Only the edge tile (or a padding tile from the spatial split) needs
        # masking; full tiles take the select-free path.
        is_partial = (tile_base + tile_hw) > hw_total
        @pl.when(jnp.logical_not(is_partial))
        def _():
            run_chunks(False)
        @pl.when(is_partial)
        def _():
            run_chunks(True)
    else:
        run_chunks(False)

    @pl.when(j == pl.num_programs(1) - 1)
    def _():
        inter_out[0] = jnp.sum(inter_acc[...], axis=-1, keepdims=True)    # (C, 1)
        psum_out[0] = jnp.sum(psum_acc[...], axis=-1, keepdims=True)
        tsum_out[0] = jnp.sum(tsum_acc[...], axis=-1, keepdims=True)


def multiclass_dice_loss(logits, targets, eps: float = EPSILON):
    """logits, targets: (N, C, H, W) arrays (NCHW, as in PyTorch).

    Any float/int dtype is accepted (kernel upcasts per chunk), so bf16 logits
    or int8 one-hot targets directly cut HBM traffic.
    """
    # TODO(synk): offer a label-map (N, H, W int) target variant that rebuilds
    # the one-hot in-kernel via broadcasted_iota == label; ~Cx fewer target
    # bytes, but it is an API change relative to the PyTorch module.
    N, C, H, W = logits.shape
    assert targets.shape == (N, C, H, W)
    HW = H * W

    # Free reshapes only.
    lg = logits.reshape(N, C, HW)
    tg = targets.reshape(N, C, HW)

    # ---- Tile sizing --------------------------------------------------------
    chunk = min(512, _round_up(max(HW, 1), 128))          # lane-chunk width

    def _col_bytes(dtype):                                 # VMEM bytes per column
        item = jnp.dtype(dtype).itemsize
        sub = max(8, 8 * (4 // max(1, item)))              # sublane packing
        return _round_up(C, sub) * item

    budget, vmem_limit = _vmem_budget_and_limit()
    acc_bytes = 3 * _round_up(C, 8) * chunk * 4
    in_col_bytes = 2 * (_col_bytes(lg.dtype) + _col_bytes(tg.dtype))  # x2 double-buffer
    avail = max(budget - acc_bytes - (2 << 20), in_col_bytes * chunk)
    cap_vmem = avail // in_col_bytes
    # Cap HBM bytes per input per grid step at ~4 MiB (>> per-step overhead at
    # HBM speed, still leaves double-buffer headroom on v7x's 64 MiB VMEM).
    max_item = max(lg.dtype.itemsize, tg.dtype.itemsize)
    cap_step = (4 << 20) // max(1, C * max_item)
    hw_ceil = _round_up(HW, chunk)
    tile_hw = max(chunk, (min(cap_vmem, cap_step, hw_ceil) // chunk) * chunk)

    num_tiles = pl.cdiv(HW, tile_hw)

    # ---- Parallel (megacore) split ------------------------------------------
    # Batch is the parallel axis; with a single image, split the spatial tiles
    # in two so both v7x TensorCores get work.
    S = 1 if (N >= 2 or num_tiles < 2) else 2
    tiles_per_split = pl.cdiv(num_tiles, S)
    NP = N * S
    needs_mask = (HW % tile_hw != 0) or (S * tiles_per_split != num_tiles)

    def in_map(p, j):
        if S == 1:
            return (p, 0, j)
        jg = (p % S) * tiles_per_split + j
        if S * tiles_per_split != num_tiles:
            # Padding tiles re-read the last valid tile; the kernel masks them
            # out entirely, so they contribute nothing.
            jg = jnp.minimum(jg, num_tiles - 1)
        return (p // S, 0, jg)

    out_map = lambda p, j: (p, 0, 0)

    kernel = functools.partial(
        _dice_partials_kernel,
        hw_total=HW, tile_hw=tile_hw, chunk=chunk,
        spatial_splits=S, tiles_per_split=tiles_per_split,
        needs_mask=needs_mask)

    part_sds = jax.ShapeDtypeStruct((NP, C, 1), jnp.float32)
    inter_p, psum_p, tsum_p = pl.pallas_call(
        kernel,
        out_shape=(part_sds, part_sds, part_sds),
        grid_spec=pltpu.PrefetchScalarGridSpec(
            num_scalar_prefetch=0,
            grid=(NP, tiles_per_split),
            in_specs=[
                pl.BlockSpec((1, C, tile_hw), in_map),
                pl.BlockSpec((1, C, tile_hw), in_map),
            ],
            out_specs=[
                pl.BlockSpec((1, C, 1), out_map),
                pl.BlockSpec((1, C, 1), out_map),
                pl.BlockSpec((1, C, 1), out_map),
            ],
            scratch_shapes=[
                pltpu.VMEM((C, chunk), jnp.float32),   # sum(t * p)
                pltpu.VMEM((C, chunk), jnp.float32),   # sum(p)
                pltpu.VMEM((C, chunk), jnp.float32),   # sum(t)
            ],
        ),
        compiler_params=pltpu.CompilerParams(
            dimension_semantics=("parallel", "arbitrary"),
            vmem_limit_bytes=vmem_limit,
        ),
    )(lg, tg)

    # ---- Tiny epilogue in plain JAX (megacore-safe) --------------------------
    inter = jnp.sum(inter_p, axis=(0, 2))                     # (C,)
    psum = jnp.sum(psum_p, axis=(0, 2))
    tsum = jnp.sum(tsum_p, axis=(0, 2))
    intersection = jnp.maximum(inter, eps)                    # clamp_min
    cardinality = jnp.maximum(tsum + psum, eps)               # clamp_min
    dice = (2.0 * intersection + eps) / (cardinality + eps)
    loss = (1.0 - dice) * (tsum > 0.0).astype(jnp.float32)
    return jnp.mean(loss)


def _reference(logits, targets, eps=EPSILON):
    """Pure-JAX replica of the PyTorch forward, for validation."""
    probas = jax.nn.softmax(logits, axis=1)
    intersection = jnp.maximum((targets * probas).sum((0, 2, 3)), eps)
    cardinality = jnp.maximum((targets + probas).sum((0, 2, 3)), eps)
    dice = (2.0 * intersection + eps) / (cardinality + eps)
    loss = 1.0 - dice
    mask = (targets.sum((0, 2, 3)) > 0).astype(loss.dtype)
    return (loss * mask).mean()


if __name__ == "__main__":
    key = jax.random.PRNGKey(0)
    k1, k2 = jax.random.split(key)

    N, C, H, W = 2, 4, 16, 16
    logits = jax.random.normal(k1, (N, C, H, W), dtype=jnp.float32)
    # One-hot targets: random labels per pixel, laid out NCHW.
    labels = jax.random.randint(k2, (N, H, W), 0, C)
    targets = jnp.transpose(jax.nn.one_hot(labels, C, dtype=jnp.float32),
                            (0, 3, 1, 2))                    # (N, C, H, W)

    loss_fn = jax.jit(multiclass_dice_loss)
    out = jax.block_until_ready(loss_fn(logits, targets))

    ref = _reference(logits, targets)
    assert jnp.allclose(out, ref, atol=1e-5, rtol=1e-5), (out, ref)

    print("KERNEL_OK")
</pallas_src>

<mosaic_0001>
module attributes {stable_mosaic.version = 11 : i64} {
  func.func @_dice_partials_kernel(%arg0: i32, %arg1: i32, %arg2: memref<1x4x256xf32, #tpu.memory_space<vmem>>, %arg3: memref<1x4x256xf32, #tpu.memory_space<vmem>>, %arg4: memref<1x4x1xf32, #tpu.memory_space<vmem>>, %arg5: memref<1x4x1xf32, #tpu.memory_space<vmem>>, %arg6: memref<1x4x1xf32, #tpu.memory_space<vmem>>, %arg7: memref<4x256xf32, #tpu.memory_space<vmem>>, %arg8: memref<4x256xf32, #tpu.memory_space<vmem>>, %arg9: memref<4x256xf32, #tpu.memory_space<vmem>>) attributes {dimension_semantics = [#tpu.dimension_semantics<parallel>, #tpu.dimension_semantics<arbitrary>], iteration_bounds = array<i64: 2, 1>, scalar_prefetch = 0 : i64, scratch_operands = 3 : i64, tpu.core_type = #tpu.core_type<tc>, window_params = [{transform_indices = @transform_0, window_bounds = array<i64: 1, 4, 256>}, {transform_indices = @transform_1, window_bounds = array<i64: 1, 4, 256>}, {transform_indices = @transform_2, window_bounds = array<i64: 1, 4, 1>}, {transform_indices = @transform_3, window_bounds = array<i64: 1, 4, 1>}, {transform_indices = @transform_4, window_bounds = array<i64: 1, 4, 1>}]} {
    %c0_i32 = arith.constant 0 : i32
    %0 = arith.cmpi eq, %arg1, %c0_i32 : i32
    %1 = arith.extui %0 : i1 to i32
    %c0_i32_0 = arith.constant 0 : i32
    %2 = arith.cmpi ne, %1, %c0_i32_0 : i32
    scf.if %2 {
      %cst_21 = arith.constant 0.000000e+00 : f32
      %30 = vector.broadcast %cst_21 : f32 to vector<4x256xf32>
      %c0_22 = arith.constant 0 : index
      %c0_23 = arith.constant 0 : index
      %31 = vector.load %arg7[%c0_22, %c0_23] : memref<4x256xf32, #tpu.memory_space<vmem>>, vector<4x256xf32>
      tpu.vector_store %arg7[%c0_22, %c0_23], %30 {strides = array<i32>} : memref<4x256xf32, #tpu.memory_space<vmem>>, vector<4x256xf32>,
      %cst_24 = arith.constant 0.000000e+00 : f32
      %32 = vector.broadcast %cst_24 : f32 to vector<4x256xf32>
      %c0_25 = arith.constant 0 : index
      %c0_26 = arith.constant 0 : index
      %33 = vector.load %arg8[%c0_25, %c0_26] : memref<4x256xf32, #tpu.memory_space<vmem>>, vector<4x256xf32>
      tpu.vector_store %arg8[%c0_25, %c0_26], %32 {strides = array<i32>} : memref<4x256xf32, #tpu.memory_space<vmem>>, vector<4x256xf32>,
      %cst_27 = arith.constant 0.000000e+00 : f32
      %34 = vector.broadcast %cst_27 : f32 to vector<4x256xf32>
      %c0_28 = arith.constant 0 : index
      %c0_29 = arith.constant 0 : index
      %35 = vector.load %arg9[%c0_28, %c0_29] : memref<4x256xf32, #tpu.memory_space<vmem>>, vector<4x256xf32>
      tpu.vector_store %arg9[%c0_28, %c0_29], %34 {strides = array<i32>} : memref<4x256xf32, #tpu.memory_space<vmem>>, vector<4x256xf32>,
    } else {
    }
    %c0 = arith.constant 0 : index
    %c0_1 = arith.constant 0 : index
    %c0_2 = arith.constant 0 : index
    %3 = vector.load %arg2[%c0, %c0_1, %c0_2] : memref<1x4x256xf32, #tpu.memory_space<vmem>>, vector<1x4x256xf32>
    %4 = vector.shape_cast %3 : vector<1x4x256xf32> to vector<4x256xf32>
    %c0_3 = arith.constant 0 : index
    %c0_4 = arith.constant 0 : index
    %c0_5 = arith.constant 0 : index
    %5 = vector.load %arg3[%c0_3, %c0_4, %c0_5] : memref<1x4x256xf32, #tpu.memory_space<vmem>>, vector<1x4x256xf32>
    %6 = vector.shape_cast %5 : vector<1x4x256xf32> to vector<4x256xf32>
    %cst = arith.constant dense<0xFF800000> : vector<256xf32>
    %7 = vector.multi_reduction <maximumf>, %4, %cst [0] : vector<4x256xf32> to vector<256xf32>
    %8 = vector.shape_cast %7 : vector<256xf32> to vector<1x256xf32>
    %9 = vector.broadcast %8 : vector<1x256xf32> to vector<4x256xf32>
    %10 = arith.subf %4, %9 : vector<4x256xf32>
    %11 = math.exp %10 : vector<4x256xf32>
    %cst_6 = arith.constant dense<0.000000e+00> : vector<256xf32>
    %12 = vector.multi_reduction <add>, %11, %cst_6 [0] : vector<4x256xf32> to vector<256xf32>
    %13 = vector.shape_cast %12 : vector<256xf32> to vector<1x256xf32>
    %14 = tpu.reciprocal %13 : vector<1x256xf32> -> vector<1x256xf32>
    %15 = vector.broadcast %14 : vector<1x256xf32> to vector<4x256xf32>
    %16 = arith.mulf %11, %15 : vector<4x256xf32>
    %c0_7 = arith.constant 0 : index
    %c0_8 = arith.constant 0 : index
    %17 = vector.load %arg7[%c0_7, %c0_8] : memref<4x256xf32, #tpu.memory_space<vmem>>, vector<4x256xf32>
    %18 = arith.mulf %6, %16 : vector<4x256xf32>
    %19 = arith.addf %17, %18 : vector<4x256xf32>
    %c0_9 = arith.constant 0 : index
    %c0_10 = arith.constant 0 : index
    %20 = vector.load %arg7[%c0_9, %c0_10] : memref<4x256xf32, #tpu.memory_space<vmem>>, vector<4x256xf32>
    tpu.vector_store %arg7[%c0_9, %c0_10], %19 {strides = array<i32>} : memref<4x256xf32, #tpu.memory_space<vmem>>, vector<4x256xf32>,
    %c0_11 = arith.constant 0 : index
    %c0_12 = arith.constant 0 : index
    %21 = vector.load %arg8[%c0_11, %c0_12] : memref<4x256xf32, #tpu.memory_space<vmem>>, vector<4x256xf32>
    %22 = arith.addf %21, %16 : vector<4x256xf32>
    %c0_13 = arith.constant 0 : index
    %c0_14 = arith.constant 0 : index
    %23 = vector.load %arg8[%c0_13, %c0_14] : memref<4x256xf32, #tpu.memory_space<vmem>>, vector<4x256xf32>
    tpu.vector_store %arg8[%c0_13, %c0_14], %22 {strides = array<i32>} : memref<4x256xf32, #tpu.memory_space<vmem>>, vector<4x256xf32>,
    %c0_15 = arith.constant 0 : index
    %c0_16 = arith.constant 0 : index
    %24 = vector.load %arg9[%c0_15, %c0_16] : memref<4x256xf32, #tpu.memory_space<vmem>>, vector<4x256xf32>
    %25 = arith.addf %24, %6 : vector<4x256xf32>
    %c0_17 = arith.constant 0 : index
    %c0_18 = arith.constant 0 : index
    %26 = vector.load %arg9[%c0_17, %c0_18] : memref<4x256xf32, #tpu.memory_space<vmem>>, vector<4x256xf32>
    tpu.vector_store %arg9[%c0_17, %c0_18], %25 {strides = array<i32>} : memref<4x256xf32, #tpu.memory_space<vmem>>, vector<4x256xf32>,
    %c0_i32_19 = arith.constant 0 : i32
    %27 = arith.cmpi eq, %arg1, %c0_i32_19 : i32
    %28 = arith.extui %27 : i1 to i32
    %c0_i32_20 = arith.constant 0 : i32
    %29 = arith.cmpi ne, %28, %c0_i32_20 : i32
    scf.if %29 {
      %c0_21 = arith.constant 0 : index
      %c0_22 = arith.constant 0 : index
      %30 = vector.load %arg7[%c0_21, %c0_22] : memref<4x256xf32, #tpu.memory_space<vmem>>, vector<4x256xf32>
      %cst_23 = arith.constant dense<0.000000e+00> : vector<4xf32>
      %31 = vector.multi_reduction <add>, %30, %cst_23 [1] : vector<4x256xf32> to vector<4xf32>
      %32 = vector.shape_cast %31 : vector<4xf32> to vector<4x1xf32>
      %c0_24 = arith.constant 0 : index
      %c0_25 = arith.constant 0 : index
      %c0_26 = arith.constant 0 : index
      %33 = vector.load %arg4[%c0_24, %c0_25, %c0_26] : memref<1x4x1xf32, #tpu.memory_space<vmem>>, vector<1x4x1xf32>
      %34 = vector.shape_cast %33 : vector<1x4x1xf32> to vector<4x1xf32>
      %35 = vector.shape_cast %32 : vector<4x1xf32> to vector<1x4x1xf32>
      tpu.vector_store %arg4[%c0_24, %c0_25, %c0_26], %35 {strides = array<i32>} : memref<1x4x1xf32, #tpu.memory_space<vmem>>, vector<1x4x1xf32>,
      %c0_27 = arith.constant 0 : index
      %c0_28 = arith.constant 0 : index
      %36 = vector.load %arg8[%c0_27, %c0_28] : memref<4x256xf32, #tpu.memory_space<vmem>>, vector<4x256xf32>
      %cst_29 = arith.constant dense<0.000000e+00> : vector<4xf32>
      %37 = vector.multi_reduction <add>, %36, %cst_29 [1] : vector<4x256xf32> to vector<4xf32>
      %38 = vector.shape_cast %37 : vector<4xf32> to vector<4x1xf32>
      %c0_30 = arith.constant 0 : index
      %c0_31 = arith.constant 0 : index
      %c0_32 = arith.constant 0 : index
      %39 = vector.load %arg5[%c0_30, %c0_31, %c0_32] : memref<1x4x1xf32, #tpu.memory_space<vmem>>, vector<1x4x1xf32>
      %40 = vector.shape_cast %39 : vector<1x4x1xf32> to vector<4x1xf32>
      %41 = vector.shape_cast %38 : vector<4x1xf32> to vector<1x4x1xf32>
      tpu.vector_store %arg5[%c0_30, %c0_31, %c0_32], %41 {strides = array<i32>} : memref<1x4x1xf32, #tpu.memory_space<vmem>>, vector<1x4x1xf32>,
      %c0_33 = arith.constant 0 : index
      %c0_34 = arith.constant 0 : index
      %42 = vector.load %arg9[%c0_33, %c0_34] : memref<4x256xf32, #tpu.memory_space<vmem>>, vector<4x256xf32>
      %cst_35 = arith.constant dense<0.000000e+00> : vector<4xf32>
      %43 = vector.multi_reduction <add>, %42, %cst_35 [1] : vector<4x256xf32> to vector<4xf32>
      %44 = vector.shape_cast %43 : vector<4xf32> to vector<4x1xf32>
      %c0_36 = arith.constant 0 : index
      %c0_37 = arith.constant 0 : index
      %c0_38 = arith.constant 0 : index
      %45 = vector.load %arg6[%c0_36, %c0_37, %c0_38] : memref<1x4x1xf32, #tpu.memory_space<vmem>>, vector<1x4x1xf32>
      %46 = vector.shape_cast %45 : vector<1x4x1xf32> to vector<4x1xf32>
      %47 = vector.shape_cast %44 : vector<4x1xf32> to vector<1x4x1xf32>
      tpu.vector_store %arg6[%c0_36, %c0_37, %c0_38], %47 {strides = array<i32>} : memref<1x4x1xf32, #tpu.memory_space<vmem>>, vector<1x4x1xf32>,
    } else {
    }
    return
  }
  func.func @transform_0(%arg0: i32, %arg1: i32) -> (i32, i32, i32) {
    %c0_i32 = arith.constant 0 : i32
    %c0_i32_0 = arith.constant 0 : i32
    return %arg0, %c0_i32, %arg1 : i32, i32, i32
  }
  func.func @transform_1(%arg0: i32, %arg1: i32) -> (i32, i32, i32) {
    %c0_i32 = arith.constant 0 : i32
    %c0_i32_0 = arith.constant 0 : i32
    return %arg0, %c0_i32, %arg1 : i32, i32, i32
  }
  func.func @transform_2(%arg0: i32, %arg1: i32) -> (i32, i32, i32) {
    %c0_i32 = arith.constant 0 : i32
    %c0_i32_0 = arith.constant 0 : i32
    %c0_i32_1 = arith.constant 0 : i32
    return %arg0, %c0_i32, %c0_i32_0 : i32, i32, i32
  }
  func.func @transform_3(%arg0: i32, %arg1: i32) -> (i32, i32, i32) {
    %c0_i32 = arith.constant 0 : i32
    %c0_i32_0 = arith.constant 0 : i32
    %c0_i32_1 = arith.constant 0 : i32
    return %arg0, %c0_i32, %c0_i32_0 : i32, i32, i32
  }
  func.func @transform_4(%arg0: i32, %arg1: i32) -> (i32, i32, i32) {
    %c0_i32 = arith.constant 0 : i32
    %c0_i32_0 = arith.constant 0 : i32
    %c0_i32_1 = arith.constant 0 : i32
    return %arg0, %c0_i32, %c0_i32_0 : i32, i32, i32
  }
}

</mosaic_0001>

<llo_original>
// kernel: multiclass_dice_loss.1
$region0: #{multiclass_dice_loss.1}
  #allocation0 [shape = 'u32[]', space=smem, size = 0x4, offset = 0x4, fixed_abs, tag = 'smem constant byte address 0x4 - core index']
  #allocation1 [shape = 'u32[144,128]{1,0:T(1,128)}', space=vmem, size = 0x12000, scoped, tag = 'internal scratch']
  #allocation2 [shape = 'f32[4,256]{1,0:T(4,128)}', space=vmem, size = 0x1000, scoped, tag = 'scratch operand']
  #allocation3 [shape = 'f32[4,256]{1,0:T(4,128)}', space=vmem, size = 0x1000, scoped, tag = 'scratch operand']
  #allocation4 [shape = 'f32[4,256]{1,0:T(4,128)}', space=vmem, size = 0x1000, scoped, tag = 'scratch operand']
  %s0 = inlined_call_operand.vmem [shape: f32[2,4,256], index: 0, kind: input, shape index: {}]
  %s1 = inlined_call_operand.vmem [shape: f32[2,4,256], index: 1, kind: input, shape index: {}]
  %s2 = inlined_call_operand.vmem [shape: f32[2,4,1], index: 2, kind: output, shape index: {0}]
  %s3 = inlined_call_operand.vmem [shape: f32[2,4,1], index: 3, kind: output, shape index: {1}]
  %s4 = inlined_call_operand.vmem [shape: f32[2,4,1], index: 4, kind: output, shape index: {2}]
  %5 = xla_tuple %s2, %s3, %s4
  %s6 = sld [smem:[#allocation0]]
  $region65: #{multiclass_dice_loss.1} parent=0
    _
  %s8 = ssub.s32 1, %s6
  %s9 = scalar_select 0, %s8, %s6
  loop: start=0, step=1, limit=4
  $region2: #{multiclass_dice_loss.1} parent=0 // loop_pre_header
    _
  $region3: #{multiclass_dice_loss.1} parent=0 // loop_header
    %s11 = sphi 0, %s15
    %p12 = scmp.ge.s32.totalorder %s11, 4
    %s18 = sphi 0, %s30
    %s19 = sphi 0, %s26
    %s20 = sphi 0, %s18
    %s21 = sphi 0, %s19
    %s22 = sphi 0, %s20
    %s23 = sphi 0, %s21
    %s35 = sphi 0, %s37
    %s38 = sphi 0, %s35
    %s39 = sphi 0, %s38
    %s55 = sphi 0, %s39
    %s63 = sphi 0, %s65
    %s66 = sphi 0, %s63
    %s67 = sphi 0, %s66
    %s83 = sphi 0, %s67
    %s89 = sphi 0, %s91
    %s92 = sphi 0, %s89
    %s93 = sphi 0, %s92
    %s109 = sphi 0, %s93
    %s115 = sphi 0, %s117
    %s118 = sphi 0, %s115
    %s119 = sphi 0, %s118
    %s135 = sphi 0, %s119
    %s141 = sphi 0, %s143
    %s144 = sphi 0, %s141
    %s145 = sphi 0, %s144
    %s161 = sphi 0, %s145
  $region4: #{multiclass_dice_loss.1} parent=0 // loop_header_branch
    %14 = sbr.rel (%p12) target = $region8
  $region5: #{multiclass_dice_loss.1} parent=0 // loop_body
    %s16 = ssub.s32 %s11, 1
    %s17 = ssub.s32 %s11, 2
    %s24 = sadd.s32 1, %s19
    %p25 = scmp.ge.s32.totalorder %s24, 1
    %s26 = scalar_select %p25, 0, %s24
    %s27 = sadd.s32 1, %s18
    %s28 = scalar_select %p25, %s27, %s18
    %p29 = scmp.ge.s32.totalorder %s28, 2
    %s30 = scalar_select %p29, 0, %s28
    %s31 = ssub.s32 %s18, %s30
    %s32 = ssub.s32 %s19, %s26
    %s33 = sor.u32 %s31, %s32
    %p34 = scmp.eq.s32.totalorder %s33, 0
    %s36 = sadd.s32 %s35, 1
    %s37 = scalar_select %p34, %s35, %s36
    %p40 = pneg %p34
    %p41 = scmp.eq.s32.totalorder %s11, 1
    %p42 = por %p40, %p41
    %p43 = scmp.ne.s32.totalorder %s35, %s38
    %p44 = scmp.eq.s32.totalorder %s11, 0
    %p45 = por %p43, %p44
    %p46 = scmp.ne.s32.totalorder %s35, %s38
    %p47 = scmp.eq.s32.totalorder %s16, 1
    %p48 = por %p46, %p47
    %p49 = scmp.ne.s32.totalorder %s38, %s39
    %p50 = scmp.eq.s32.totalorder %s16, 0
    %p51 = por %p49, %p50
    %p52 = scmp.ne.s32.totalorder %s38, %s39
    %p53 = scmp.eq.s32.totalorder %s17, 1
    %p54 = por %p52, %p53
    %p56 = scmp.ne.s32.totalorder %s39, %s55
    %p57 = scmp.eq.s32.totalorder %s17, 0
    %p58 = por %p56, %p57
    %s59 = ssub.s32 %s18, %s30
    %s60 = ssub.s32 %s19, %s26
    %s61 = sor.u32 %s59, %s60
    %p62 = scmp.eq.s32.totalorder %s61, 0
    %s64 = sadd.s32 %s63, 1
    %s65 = scalar_select %p62, %s63, %s64
    %p68 = pneg %p62
    %p69 = scmp.eq.s32.totalorder %s11, 1
    %p70 = por %p68, %p69
    %p71 = scmp.ne.s32.totalorder %s63, %s66
    %p72 = scmp.eq.s32.totalorder %s11, 0
    %p73 = por %p71, %p72
    %p74 = scmp.ne.s32.totalorder %s63, %s66
    %p75 = scmp.eq.s32.totalorder %s16, 1
    %p76 = por %p74, %p75
    %p77 = scmp.ne.s32.totalorder %s66, %s67
    %p78 = scmp.eq.s32.totalorder %s16, 0
    %p79 = por %p77, %p78
    %p80 = scmp.ne.s32.totalorder %s66, %s67
    %p81 = scmp.eq.s32.totalorder %s17, 1
    %p82 = por %p80, %p81
    %p84 = scmp.ne.s32.totalorder %s67, %s83
    %p85 = scmp.eq.s32.totalorder %s17, 0
    %p86 = por %p84, %p85
    %s87 = ssub.s32 %s18, %s30
    %p88 = scmp.eq.s32.totalorder %s87, 0
    %s90 = sadd.s32 %s89, 1
    %s91 = scalar_select %p88, %s89, %s90
    %p94 = pneg %p88
    %p95 = scmp.eq.s32.totalorder %s11, 1
    %p96 = por %p94, %p95
    %p97 = scmp.ne.s32.totalorder %s89, %s92
    %p98 = scmp.eq.s32.totalorder %s11, 0
    %p99 = por %p97, %p98
    %p100 = scmp.ne.s32.totalorder %s89, %s92
    %p101 = scmp.eq.s32.totalorder %s16, 1
    %p102 = por %p100, %p101
    %p103 = scmp.ne.s32.totalorder %s92, %s93
    %p104 = scmp.eq.s32.totalorder %s16, 0
    %p105 = por %p103, %p104
    %p106 = scmp.ne.s32.totalorder %s92, %s93
    %p107 = scmp.eq.s32.totalorder %s17, 1
    %p108 = por %p106, %p107
    %p110 = scmp.ne.s32.totalorder %s93, %s109
    %p111 = scmp.eq.s32.totalorder %s17, 0
    %p112 = por %p110, %p111
    %s113 = ssub.s32 %s18, %s30
    %p114 = scmp.eq.s32.totalorder %s113, 0
    %s116 = sadd.s32 %s115, 1
    %s117 = scalar_select %p114, %s115, %s116
    %p120 = pneg %p114
    %p121 = scmp.eq.s32.totalorder %s11, 1
    %p122 = por %p120, %p121
    %p123 = scmp.ne.s32.totalorder %s115, %s118
    %p124 = scmp.eq.s32.totalorder %s11, 0
    %p125 = por %p123, %p124
    %p126 = scmp.ne.s32.totalorder %s115, %s118
    %p127 = scmp.eq.s32.totalorder %s16, 1
    %p128 = por %p126, %p127
    %p129 = scmp.ne.s32.totalorder %s118, %s119
    %p130 = scmp.eq.s32.totalorder %s16, 0
    %p131 = por %p129, %p130
    %p132 = scmp.ne.s32.totalorder %s118, %s119
    %p133 = scmp.eq.s32.totalorder %s17, 1
    %p134 = por %p132, %p133
    %p136 = scmp.ne.s32.totalorder %s119, %s135
    %p137 = scmp.eq.s32.totalorder %s17, 0
    %p138 = por %p136, %p137
    %s139 = ssub.s32 %s18, %s30
    %p140 = scmp.eq.s32.totalorder %s139, 0
    %s142 = sadd.s32 %s141, 1
    %s143 = scalar_select %p140, %s141, %s142
    %p146 = pneg %p140
    %p147 = scmp.eq.s32.totalorder %s11, 1
    %p148 = por %p146, %p147
    %p149 = scmp.ne.s32.totalorder %s141, %s144
    %p150 = scmp.eq.s32.totalorder %s11, 0
    %p151 = por %p149, %p150
    %p152 = scmp.ne.s32.totalorder %s141, %s144
    %p153 = scmp.eq.s32.totalorder %s16, 1
    %p154 = por %p152, %p153
    %p155 = scmp.ne.s32.totalorder %s144, %s145
    %p156 = scmp.eq.s32.totalorder %s16, 0
    %p157 = por %p155, %p156
    %p158 = scmp.ne.s32.totalorder %s144, %s145
    %p159 = scmp.eq.s32.totalorder %s17, 1
    %p160 = por %p158, %p159
    %p162 = scmp.ne.s32.totalorder %s145, %s161
    %p163 = scmp.eq.s32.totalorder %s17, 0
    %p164 = por %p162, %p163
    %p165 = scmp.le.s32.totalorder 1, %s11
    %p166 = scmp.lt.s32.totalorder %s11, 3
    %p167 = pnand %p165, %p166
    %p168 = pneg %p167
    // Predicated region
    $region9: #{multiclass_dice_loss.1} parent=5 // pred_check
      _
    $region10: #{multiclass_dice_loss.1} parent=5 // pred_check_branch
      %170 = sbr.rel (%p167) target = $region12
    $region11: #{multiclass_dice_loss.1} parent=5 // pred_region
      %s171 = ssub.s32 %s11, 1
    $region12: #{multiclass_dice_loss.1} parent=5 // pred_fallthru
      _
    %p172 = scmp.lt.s32.totalorder %s11, 2
    // Predicated region
    $region13: #{multiclass_dice_loss.1} parent=5 // pred_check
      %p173 = pneg %p172
    $region14: #{multiclass_dice_loss.1} parent=5 // pred_check_branch
      %175 = sbr.rel (%p173) target = $region16
    $region15: #{multiclass_dice_loss.1} parent=5 // pred_region
      // Predicated region
      $region17: #{multiclass_dice_loss.1} parent=15 // pred_check
        %p176 = pneg %p45
      $region18: #{multiclass_dice_loss.1} parent=15 // pred_check_branch
        %178 = sbr.rel (%p176) target = $region20
      $region19: #{multiclass_dice_loss.1} parent=15 // pred_region
        %s179 = smul.u32 2, %s19
        %p180 = scmp.lt.s32.totalorder %s18, 1
        %s181 = scalar_select %p180, %s18, 1
        %p182 = scmp.lt.s32.totalorder %s179, 1
        %s183 = scalar_select %p182, %s179, 1
        %s184 = smul.addr %s181, 2
        %s185 = sadd.s32 %s183, %s184
        %s186 = smul.addr %s185, 4
        %s187 = scalar_lea.vmem %s0, %s186
        %s188 = smul.u32 2, %s19
      $region20: #{multiclass_dice_loss.1} parent=15 // pred_fallthru
        _
      // Predicated region
      $region21: #{multiclass_dice_loss.1} parent=15 // pred_check
        %p189 = pneg %p73
      $region22: #{multiclass_dice_loss.1} parent=15 // pred_check_branch
        %191 = sbr.rel (%p189) target = $region24
      $region23: #{multiclass_dice_loss.1} parent=15 // pred_region
        %s192 = smul.u32 2, %s19
        %p193 = scmp.lt.s32.totalorder %s18, 1
        %s194 = scalar_select %p193, %s18, 1
        %p195 = scmp.lt.s32.totalorder %s192, 1
        %s196 = scalar_select %p195, %s192, 1
        %s197 = smul.addr %s194, 2
        %s198 = sadd.s32 %s196, %s197
        %s199 = smul.addr %s198, 4
        %s200 = scalar_lea.vmem %s1, %s199
        %s201 = smul.u32 2, %s19
      $region24: #{multiclass_dice_loss.1} parent=15 // pred_fallthru
        _
    $region16: #{multiclass_dice_loss.1} parent=5 // pred_fallthru
      _
    %p202 = scmp.le.s32.totalorder 1, %s11
    %p203 = scmp.lt.s32.totalorder %s11, 3
    %p204 = pnand %p202, %p203
    %p205 = pneg %p204
    // Predicated region
    $region25: #{multiclass_dice_loss.1} parent=5 // pred_check
      _
    $region26: #{multiclass_dice_loss.1} parent=5 // pred_check_branch
      %207 = sbr.rel (%p204) target = $region28
    $region27: #{multiclass_dice_loss.1} parent=5 // pred_region
      %s208 = ssub.s32 %s11, 1
      %s209 = smul.u32 2, %s21
      %p210 = scmp.lt.s32.totalorder %s20, 1
      %s211 = scalar_select %p210, %s20, 1
      %p212 = scmp.lt.s32.totalorder %s209, 1
      %s213 = scalar_select %p212, %s209, 1
      %s214 = smul.addr %s211, 2
      %s215 = sadd.s32 %s213, %s214
      %s216 = smul.addr %s215, 4
      %s217 = scalar_lea.vmem %s0, %s216
      %p218 = pneg %p51
      %p219 = pneg %p48
      %s220 = smul.u32 2, %s21
      %p221 = scmp.lt.s32.totalorder %s20, 1
      %s222 = scalar_select %p221, %s20, 1
      %p223 = scmp.lt.s32.totalorder %s220, 1
      %s224 = scalar_select %p223, %s220, 1
      %s225 = smul.addr %s222, 2
      %s226 = sadd.s32 %s224, %s225
      %s227 = smul.addr %s226, 4
      %s228 = scalar_lea.vmem %s1, %s227
      %p229 = pneg %p79
      %p230 = pneg %p76
      %p231 = pneg %p105
      %p232 = pneg %p102
      %p233 = scmp.lt.s32.totalorder %s20, 1
      %s234 = scalar_select %p233, %s20, 1
      %s235 = smul.addr %s234, 4
      %s236 = scalar_lea.vmem %s2, %s235
      %p237 = pneg %p131
      %p238 = pneg %p128
      %p239 = scmp.lt.s32.totalorder %s20, 1
      %s240 = scalar_select %p239, %s20, 1
      %s241 = smul.addr %s240, 4
      %s242 = scalar_lea.vmem %s3, %s241
      %p243 = pneg %p157
      %p244 = pneg %p154
      %p245 = scmp.lt.s32.totalorder %s20, 1
      %s246 = scalar_select %p245, %s20, 1
      %s247 = smul.addr %s246, 4
      %s248 = scalar_lea.vmem %s4, %s247
      %s249 = smul.u32 2, %s21
      %p250 = scmp.lt.s32.totalorder %s20, 1
      %s251 = scalar_select %p250, %s20, 1
      %p252 = scmp.lt.s32.totalorder %s249, 1
      %s253 = scalar_select %p252, %s249, 1
      %s254 = smul.addr %s251, 2
      %s255 = sadd.s32 %s253, %s254
      %s256 = smul.addr %s255, 4
      %s257 = scalar_lea.vmem %s0, %s256
      %s258 = smul.u32 2, %s21
      %s259 = smul.u32 2, %s21
      %p260 = scmp.lt.s32.totalorder %s20, 1
      %s261 = scalar_select %p260, %s20, 1
      %p262 = scmp.lt.s32.totalorder %s259, 1
      %s263 = scalar_select %p262, %s259, 1
      %s264 = smul.addr %s261, 2
      %s265 = sadd.s32 %s263, %s264
      %s266 = smul.addr %s265, 4
      %s267 = scalar_lea.vmem %s1, %s266
      %s268 = smul.u32 2, %s21
      %p269 = scmp.lt.s32.totalorder %s20, 1
      %s270 = scalar_select %p269, %s20, 1
      %s271 = smul.addr %s270, 4
      %s272 = scalar_lea.vmem %s2, %s271
      %p273 = scmp.lt.s32.totalorder %s20, 1
      %s274 = scalar_select %p273, %s20, 1
      %s275 = smul.addr %s274, 4
      %s276 = scalar_lea.vmem %s3, %s275
      %p277 = scmp.lt.s32.totalorder %s20, 1
      %s278 = scalar_select %p277, %s20, 1
      %s279 = smul.addr %s278, 4
      %s280 = scalar_lea.vmem %s4, %s279
      %p281 = scmp.eq.s32.totalorder %s21, 0
      // Predicated region
      $region29: #{multiclass_dice_loss.1} parent=27 // pred_check
        %p282 = pneg %p281
      $region30: #{multiclass_dice_loss.1} parent=27 // pred_check_branch
        %284 = sbr.rel (%p282) target = $region32
      $region31: #{multiclass_dice_loss.1} parent=27 // pred_region
        %285 = vst [vmem:[#allocation2] sm:$0xff] 0.0
        %286 = vst [vmem:[#allocation3] sm:$0xff] 0.0
        %287 = vst [vmem:[#allocation4] sm:$0xff] 0.0
      $region32: #{multiclass_dice_loss.1} parent=27 // pred_fallthru
        _
      %v288 = vld [vmem:[%s257] sm:$0xff]
      %v289 = vld [vmem:[%s267] sm:$0xff]
      %v291 = vcombine.high %v288, %v288
      %vm293 = vcmask 1043456
      %v294 = vsel %vm293, %v288, -inf
      %v295 = vrot.slane %v294, 4
      %v296 = vmax.f32 %v294, %v295
      %v297 = vrot.slane %v296, 2
      %v298 = vmax.f32 %v296, %v297
      %v299 = vrot.slane %v298, 1
      %v300 = vmax.f32 %v298, %v299
      %v301 = vsel %vm293, %v291, -inf
      %v302 = vrot.slane %v301, 4
      %v303 = vmax.f32 %v301, %v302
      %v304 = vrot.slane %v303, 2
      %v305 = vmax.f32 %v303, %v304
      %v306 = vrot.slane %v305, 1
      %v307 = vmax.f32 %v305, %v306
      %v310 = vcombine.low %v300, %v307
      %v312 = vsub.f32 %v288, %v310
      %v313 = vmul.f32 %v312, 1.442695
      %v314 = vpow.pop %v313
      %v316 = vcombine.high %v314, %v314
      %v318 = vsel %vm293, %v314, 0.0
      %v319 = vrot.slane %v318, 4
      %v320 = vadd.f32 %v318, %v319
      %v321 = vrot.slane %v320, 2
      %v322 = vadd.f32 %v320, %v321
      %v323 = vrot.slane %v322, 1
      %v324 = vadd.f32 %v322, %v323
      %v325 = vsel %vm293, %v316, 0.0
      %v326 = vrot.slane %v325, 4
      %v327 = vadd.f32 %v325, %v326
      %v328 = vrot.slane %v327, 2
      %v329 = vadd.f32 %v327, %v328
      %v330 = vrot.slane %v329, 1
      %v331 = vadd.f32 %v329, %v330
      %v332 = vrcp.pop %v324
      %v333 = vrcp.pop %v331
      %v336 = vcombine.low %v332, %v333
      %v338 = vmul.f32 %v314, %v336
      %v339 = vld [vmem:[#allocation2] sm:$0xff]
      %v340 = vmul.f32 %v289, %v338
      %v341 = vadd.f32 %v339, %v340
      %342 = vst [vmem:[#allocation2] sm:$0xff] %v341
      %v343 = vld [vmem:[#allocation3] sm:$0xff]
      %v344 = vadd.f32 %v343, %v338
      %345 = vst [vmem:[#allocation3] sm:$0xff] %v344
      %v346 = vld [vmem:[#allocation4] sm:$0xff]
      %v347 = vadd.f32 %v346, %v289
      %348 = vst [vmem:[#allocation4] sm:$0xff] %v347
      // Predicated region
      $region33: #{multiclass_dice_loss.1} parent=27 // pred_check
        %p349 = pneg %p281
      $region34: #{multiclass_dice_loss.1} parent=27 // pred_check_branch
        %351 = sbr.rel (%p349) target = $region36
      $region35: #{multiclass_dice_loss.1} parent=27 // pred_region
        %v352 = vld [vmem:[#allocation2] sm:$0xff]
        %v354 = vcombine.high %v352, %v352
        %v356 = vsel %vm293, %v352, 0.0
        %v357 = vsel %vm293, %v354, 0.0
        %v358 = vadd.f32 %v356, %v357
        %359 = vadd.xlane.f32.xlu0 %v358
        %v360 = vpop.xlane.xlu0 %359
        %vm361 = vcmask 3072
        %362 = vst.msk [vmem:[%s272] sm:$0xf] %vm361, %v360
        %v363 = vld [vmem:[#allocation3] sm:$0xff]
        %v365 = vcombine.high %v363, %v363
        %v367 = vsel %vm293, %v363, 0.0
        %v368 = vsel %vm293, %v365, 0.0
        %v369 = vadd.f32 %v367, %v368
        %370 = vadd.xlane.f32.xlu0 %v369
        %v371 = vpop.xlane.xlu0 %370
        %372 = vst.msk [vmem:[%s276] sm:$0xf] %vm361, %v371
        %v373 = vld [vmem:[#allocation4] sm:$0xff]
        %v375 = vcombine.high %v373, %v373
        %v377 = vsel %vm293, %v373, 0.0
        %v378 = vsel %vm293, %v375, 0.0
        %v379 = vadd.f32 %v377, %v378
        %380 = vadd.xlane.f32.xlu0 %v379
        %v381 = vpop.xlane.xlu0 %380
        %382 = vst.msk [vmem:[%s280] sm:$0xf] %vm361, %v381
      $region36: #{multiclass_dice_loss.1} parent=27 // pred_fallthru
        _
      %p383 = scmp.lt.s32.totalorder %s20, 1
      %s384 = scalar_select %p383, %s20, 1
      %s385 = smul.addr %s384, 4
      %s386 = scalar_lea.vmem %s2, %s385
      %p387 = scmp.lt.s32.totalorder %s20, 1
      %s388 = scalar_select %p387, %s20, 1
      %s389 = smul.addr %s388, 4
      %s390 = scalar_lea.vmem %s3, %s389
      %p391 = scmp.lt.s32.totalorder %s20, 1
      %s392 = scalar_select %p391, %s20, 1
      %s393 = smul.addr %s392, 4
      %s394 = scalar_lea.vmem %s4, %s393
      // Predicated region
      $region37: #{multiclass_dice_loss.1} parent=27 // pred_check
        %p395 = pneg %p102
      $region38: #{multiclass_dice_loss.1} parent=27 // pred_check_branch
        %397 = sbr.rel (%p395) target = $region40
      $region39: #{multiclass_dice_loss.1} parent=27 // pred_region
        _
      $region40: #{multiclass_dice_loss.1} parent=27 // pred_fallthru
        _
      // Predicated region
      $region41: #{multiclass_dice_loss.1} parent=27 // pred_check
        %p398 = pneg %p128
      $region42: #{multiclass_dice_loss.1} parent=27 // pred_check_branch
        %400 = sbr.rel (%p398) target = $region44
      $region43: #{multiclass_dice_loss.1} parent=27 // pred_region
        _
      $region44: #{multiclass_dice_loss.1} parent=27 // pred_fallthru
        _
      // Predicated region
      $region45: #{multiclass_dice_loss.1} parent=27 // pred_check
        %p401 = pneg %p154
      $region46: #{multiclass_dice_loss.1} parent=27 // pred_check_branch
        %403 = sbr.rel (%p401) target = $region48
      $region47: #{multiclass_dice_loss.1} parent=27 // pred_region
        _
      $region48: #{multiclass_dice_loss.1} parent=27 // pred_fallthru
        _
    $region28: #{multiclass_dice_loss.1} parent=5 // pred_fallthru
      _
    %p404 = scmp.le.s32.totalorder 2, %s11
    // Predicated region
    $region49: #{multiclass_dice_loss.1} parent=5 // pred_check
      %p405 = pneg %p404
    $region50: #{multiclass_dice_loss.1} parent=5 // pred_check_branch
      %407 = sbr.rel (%p405) target = $region52
    $region51: #{multiclass_dice_loss.1} parent=5 // pred_region
      %s408 = ssub.s32 %s11, 2
      // Predicated region
      $region53: #{multiclass_dice_loss.1} parent=51 // pred_check
        %p409 = pneg %p108
      $region54: #{multiclass_dice_loss.1} parent=51 // pred_check_branch
        %411 = sbr.rel (%p409) target = $region56
      $region55: #{multiclass_dice_loss.1} parent=51 // pred_region
        %p412 = scmp.lt.s32.totalorder %s22, 1
        %s413 = scalar_select %p412, %s22, 1
        %s414 = smul.addr %s413, 4
        %s415 = scalar_lea.vmem %s2, %s414
      $region56: #{multiclass_dice_loss.1} parent=51 // pred_fallthru
        _
      // Predicated region
      $region57: #{multiclass_dice_loss.1} parent=51 // pred_check
        %p416 = pneg %p134
      $region58: #{multiclass_dice_loss.1} parent=51 // pred_check_branch
        %418 = sbr.rel (%p416) target = $region60
      $region59: #{multiclass_dice_loss.1} parent=51 // pred_region
        %p419 = scmp.lt.s32.totalorder %s22, 1
        %s420 = scalar_select %p419, %s22, 1
        %s421 = smul.addr %s420, 4
        %s422 = scalar_lea.vmem %s3, %s421
      $region60: #{multiclass_dice_loss.1} parent=51 // pred_fallthru
        _
      // Predicated region
      $region61: #{multiclass_dice_loss.1} parent=51 // pred_check
        %p423 = pneg %p160
      $region62: #{multiclass_dice_loss.1} parent=51 // pred_check_branch
        %425 = sbr.rel (%p423) target = $region64
      $region63: #{multiclass_dice_loss.1} parent=51 // pred_region
        %p426 = scmp.lt.s32.totalorder %s22, 1
        %s427 = scalar_select %p426, %s22, 1
        %s428 = smul.addr %s427, 4
        %s429 = scalar_lea.vmem %s4, %s428
      $region64: #{multiclass_dice_loss.1} parent=51 // pred_fallthru
        _
    $region52: #{multiclass_dice_loss.1} parent=5 // pred_fallthru
      _
  $region6: #{multiclass_dice_loss.1} parent=0 // loop_footer
    %s15 = sadd.s32 1, %s11
  $region7: #{multiclass_dice_loss.1} parent=0 // loop_footer_branch
    %10 = sbr.rel target = $region3
  $region8: #{multiclass_dice_loss.1} parent=0 // loop_exit
    _

</llo_original>
